<compile_context>
chip_gen: v7x
topology: tpu7x:2x2x1
jax: 0.10.0
libtpu: 0.0.40
codegen_flags: <defaults>
</compile_context>

<pallas_src>
import math

import jax
import jax.numpy as jnp
from jax.experimental import pallas as pl
from jax.experimental.pallas import tpu as pltpu


def _round_up(x, m):
    return ((x + m - 1) // m) * m


def _pow2_tile(req, cap):
    """Largest power-of-two multiple of 128 that is <= min(req, cap), >= 128."""
    limit = max(128, min(req, cap))
    t = 128
    while t * 2 <= limit:
        t *= 2
    return t


def _divisor_tiles(total):
    """Multiples of 128 that evenly divide `total` (a multiple of 128), descending."""
    d = total // 128
    return sorted({(d // q) * 128 for q in range(1, d + 1) if d % q == 0},
                  reverse=True)


# ---------------------------------------------------------------------------
# Kernel 1 (prologue): support = x @ W        (K-tiled, f32 accumulator)
# ---------------------------------------------------------------------------
def _xw_kernel(x_ref, w_ref, sup_ref, acc_ref):
    k = pl.program_id(2)
    prod = jnp.dot(x_ref[...], w_ref[...], preferred_element_type=jnp.float32)

    @pl.when(k == 0)
    def _():
        acc_ref[...] = prod            # first K step writes directly (no zero-fill)

    @pl.when(k > 0)
    def _():
        acc_ref[...] += prod

    @pl.when(k == pl.num_programs(2) - 1)
    def _():
        sup_ref[...] = acc_ref[...].astype(sup_ref.dtype)


# ---------------------------------------------------------------------------
# Kernel 2: out = adj @ support + bias         (K-tiled, f32 accumulator)
# ---------------------------------------------------------------------------
def _adj_sup_bias_kernel(adj_ref, sup_ref, b_ref, out_ref, acc_ref):
    k = pl.program_id(2)
    prod = jnp.dot(adj_ref[...], sup_ref[...], preferred_element_type=jnp.float32)

    @pl.when(k == 0)
    def _():
        acc_ref[...] = prod

    @pl.when(k > 0)
    def _():
        acc_ref[...] += prod

    @pl.when(k == pl.num_programs(2) - 1)
    def _():
        out_ref[...] = (acc_ref[...] + b_ref[...]).astype(out_ref.dtype)


def graph_convolution(x, adj, weight, bias=None, *, tm=512, tn=None, tk=512,
                      out_dtype=None, vmem_budget_bytes=44 * 1024 * 1024):
    """Pallas TPU implementation of GraphConvolution.forward.

    out = adj @ (x @ weight) + bias

    The adjacency / support HBM stream runs in adj.dtype: pass adj in bf16 to
    halve the dominant memory traffic (accumulation always stays in f32).
    """
    n_nodes, in_features = x.shape
    assert adj.shape == (n_nodes, n_nodes)
    assert weight.shape[0] == in_features
    out_features = weight.shape[1]
    out_dtype = x.dtype if out_dtype is None else out_dtype
    compute_dtype = adj.dtype            # adj stream dtype passes through (no cast)

    # ---- tile & padded-shape selection -------------------------------------
    n_base = _round_up(n_nodes, 128)
    # Node-dim tiles: power-of-two multiples of 128 -> lcm == max, bounded pad.
    tm = _pow2_tile(tm, n_base)
    tk = _pow2_tile(tk, n_base)
    # v7x has 2 TensorCores: keep >= 2 row blocks when the graph allows it.
    if n_base >= 256 and n_base // tm < 2:
        tm = _pow2_tile(tm // 2, n_base)
    n_pad = _round_up(n_base, max(tm, tk))

    f_pad = _round_up(out_features, 128)            # lane-dense output width
    adj_bytes = jnp.dtype(compute_dtype).itemsize
    out_bytes = jnp.dtype(out_dtype).itemsize

    def k2_vmem_bytes(tn_):
        return (tm * tn_ * 4                         # f32 accumulator scratch
                + 2 * tm * tk * adj_bytes            # adj double buffer
                + 2 * tk * tn_ * adj_bytes           # support double buffer
                + 2 * tm * tn_ * out_bytes           # output double buffer
                + 2 * tn_ * 4)                       # bias

    # tn = f_pad whenever it fits VMEM (adj is then streamed from HBM once).
    tn_req = f_pad if tn is None else max(128, _round_up(tn, 128))
    tn = 128
    for cand in _divisor_tiles(f_pad):
        if cand <= tn_req and k2_vmem_bytes(cand) <= vmem_budget_bytes:
            tn = cand
            break

    k_pad = _round_up(in_features, 128)             # MXU-shaped contraction for x@W
    tk1 = _pow2_tile(512, k_pad)
    k_pad = _round_up(k_pad, tk1)

    # ---- pad inputs only when the shapes are actually ragged ----------------
    if n_pad == n_nodes:
        adj_p = adj                                  # no extra N^2 copy
    else:
        pad = n_pad - n_nodes
        adj_p = jnp.pad(adj, ((0, pad), (0, pad)))

    if n_pad == n_nodes and k_pad == in_features:
        x_p = x
    else:
        x_p = jnp.pad(x, ((0, n_pad - n_nodes), (0, k_pad - in_features)))

    if k_pad == in_features and f_pad == out_features:
        w_p = weight
    else:
        w_p = jnp.pad(weight, ((0, k_pad - in_features), (0, f_pad - out_features)))

    if bias is None:
        b_p = jnp.zeros((1, f_pad), jnp.float32)
    else:
        b_p = jnp.zeros((1, f_pad), jnp.float32).at[0, :out_features].set(
            bias.astype(jnp.float32))

    vmem_limit = 48 * 1024 * 1024   # under v7x's 64 MiB; plenty of room on v5e/v6e

    # ---- kernel 1: support = x @ W ------------------------------------------
    support = pl.pallas_call(
        _xw_kernel,
        out_shape=jax.ShapeDtypeStruct((n_pad, f_pad), compute_dtype),
        grid_spec=pltpu.PrefetchScalarGridSpec(
            num_scalar_prefetch=0,
            grid=(n_pad // tm, f_pad // tn, k_pad // tk1),
            in_specs=[
                pl.BlockSpec((tm, tk1), lambda i, j, k: (i, k)),   # x tile
                pl.BlockSpec((tk1, tn), lambda i, j, k: (k, j)),   # W tile
            ],
            out_specs=pl.BlockSpec((tm, tn), lambda i, j, k: (i, j)),
            scratch_shapes=[pltpu.VMEM((tm, tn), jnp.float32)],
        ),
        compiler_params=pltpu.CompilerParams(
            dimension_semantics=("parallel", "parallel", "arbitrary"),
            vmem_limit_bytes=vmem_limit,
        ),
    )(x_p, w_p)

    # ---- kernel 2: out = adj @ support + bias --------------------------------
    out_p = pl.pallas_call(
        _adj_sup_bias_kernel,
        out_shape=jax.ShapeDtypeStruct((n_pad, f_pad), out_dtype),
        grid_spec=pltpu.PrefetchScalarGridSpec(
            num_scalar_prefetch=0,
            grid=(n_pad // tm, f_pad // tn, n_pad // tk),
            in_specs=[
                pl.BlockSpec((tm, tk), lambda i, j, k: (i, k)),    # adj tile
                pl.BlockSpec((tk, tn), lambda i, j, k: (k, j)),    # support tile
                pl.BlockSpec((1, tn), lambda i, j, k: (0, j)),     # bias row
            ],
            out_specs=pl.BlockSpec((tm, tn), lambda i, j, k: (i, j)),
            scratch_shapes=[pltpu.VMEM((tm, tn), jnp.float32)],
        ),
        compiler_params=pltpu.CompilerParams(
            dimension_semantics=("parallel", "parallel", "arbitrary"),
            vmem_limit_bytes=vmem_limit,
        ),
    )(adj_p, support, b_p)

    if n_pad == n_nodes and f_pad == out_features:
        return out_p
    return out_p[:n_nodes, :out_features]


def _reference(x, adj, weight, bias):
    support = x @ weight
    out = adj @ support
    if bias is not None:
        out = out + bias[None, :]
    return out


if __name__ == "__main__":
    # Small, deterministic setup consistent with the module's __init__.
    n_nodes = 128
    in_features = 64
    out_features = 32

    key = jax.random.PRNGKey(0)
    k_x, k_adj, k_w, k_b = jax.random.split(key, 4)

    # Node features and a row-normalized adjacency matrix.
    x = jax.random.normal(k_x, (n_nodes, in_features), dtype=jnp.float32)
    adj_raw = (jax.random.uniform(k_adj, (n_nodes, n_nodes)) > 0.9).astype(jnp.float32)
    adj_raw = adj_raw + jnp.eye(n_nodes, dtype=jnp.float32)
    adj = adj_raw / jnp.sum(adj_raw, axis=1, keepdims=True)

    # Parameters: uniform(-stdv, stdv) with stdv = 1/sqrt(out_features),
    # matching GraphConvolution.reset_parameters (deterministic via PRNGKey).
    stdv = 1.0 / math.sqrt(out_features)
    weight = jax.random.uniform(
        k_w, (in_features, out_features), minval=-stdv, maxval=stdv, dtype=jnp.float32
    )
    bias = jax.random.uniform(
        k_b, (out_features,), minval=-stdv, maxval=stdv, dtype=jnp.float32
    )

    ref = _reference(x, adj, weight, bias)

    # f32 path: exact module semantics, tight tolerance.
    out = jax.block_until_ready(graph_convolution(x, adj, weight, bias))
    assert out.shape == (n_nodes, out_features)
    assert jnp.allclose(out, ref, atol=1e-5, rtol=1e-5), "f32 path mismatch vs reference"

    # bf16 adjacency/support stream (memory-bound fast path), f32 accumulation.
    out_bf16 = jax.block_until_ready(
        graph_convolution(x, adj.astype(jnp.bfloat16), weight, bias)
    )
    assert out_bf16.shape == (n_nodes, out_features)
    assert jnp.allclose(out_bf16, ref, atol=5e-2, rtol=5e-2), "bf16 path mismatch vs reference"

    print("KERNEL_OK")
</pallas_src>

<mosaic_0001>
module attributes {stable_mosaic.version = 11 : i64} {
  func.func @_xw_kernel(%arg0: i32, %arg1: i32, %arg2: i32, %arg3: memref<128x128xf32, #tpu.memory_space<vmem>>, %arg4: memref<128x128xf32, #tpu.memory_space<vmem>>, %arg5: memref<128x128xf32, #tpu.memory_space<vmem>>, %arg6: memref<128x128xf32, #tpu.memory_space<vmem>>) attributes {dimension_semantics = [#tpu.dimension_semantics<parallel>, #tpu.dimension_semantics<parallel>, #tpu.dimension_semantics<arbitrary>], iteration_bounds = array<i64: 1, 1, 1>, scalar_prefetch = 0 : i64, scratch_operands = 1 : i64, tpu.core_type = #tpu.core_type<tc>, window_params = [{transform_indices = @transform_0, window_bounds = array<i64: 128, 128>}, {transform_indices = @transform_1, window_bounds = array<i64: 128, 128>}, {transform_indices = @transform_2, window_bounds = array<i64: 128, 128>}]} {
    %c0 = arith.constant 0 : index
    %c0_0 = arith.constant 0 : index
    %0 = vector.load %arg3[%c0, %c0_0] : memref<128x128xf32, #tpu.memory_space<vmem>>, vector<128x128xf32>
    %c0_1 = arith.constant 0 : index
    %c0_2 = arith.constant 0 : index
    %1 = vector.load %arg4[%c0_1, %c0_2] : memref<128x128xf32, #tpu.memory_space<vmem>>, vector<128x128xf32>
    %cst = arith.constant dense<0.000000e+00> : vector<128x128xf32>
    %2 = tpu.matmul %0, %1, %cst {dimension_numbers = #tpu.dot_dimension_numbers<[1], [0], [0], [1], [0, 0, 1, 1], [], []>} : vector<128x128xf32>, vector<128x128xf32>, vector<128x128xf32> -> vector<128x128xf32>
    %c0_i32 = arith.constant 0 : i32
    %3 = arith.cmpi eq, %arg2, %c0_i32 : i32
    %4 = arith.extui %3 : i1 to i32
    %c0_i32_3 = arith.constant 0 : i32
    %5 = arith.cmpi ne, %4, %c0_i32_3 : i32
    scf.if %5 {
      %c0_8 = arith.constant 0 : index
      %c0_9 = arith.constant 0 : index
      %12 = vector.load %arg6[%c0_8, %c0_9] : memref<128x128xf32, #tpu.memory_space<vmem>>, vector<128x128xf32>
      tpu.vector_store %arg6[%c0_8, %c0_9], %2 {strides = array<i32>} : memref<128x128xf32, #tpu.memory_space<vmem>>, vector<128x128xf32>,
    } else {
    }
    %c0_i32_4 = arith.constant 0 : i32
    %6 = arith.cmpi sgt, %arg2, %c0_i32_4 : i32
    %7 = arith.extui %6 : i1 to i32
    %c0_i32_5 = arith.constant 0 : i32
    %8 = arith.cmpi ne, %7, %c0_i32_5 : i32
    scf.if %8 {
      %c0_8 = arith.constant 0 : index
      %c0_9 = arith.constant 0 : index
      %12 = vector.load %arg6[%c0_8, %c0_9] : memref<128x128xf32, #tpu.memory_space<vmem>>, vector<128x128xf32>
      %13 = arith.addf %12, %2 : vector<128x128xf32>
      %c0_10 = arith.constant 0 : index
      %c0_11 = arith.constant 0 : index
      %14 = vector.load %arg6[%c0_10, %c0_11] : memref<128x128xf32, #tpu.memory_space<vmem>>, vector<128x128xf32>
      tpu.vector_store %arg6[%c0_10, %c0_11], %13 {strides = array<i32>} : memref<128x128xf32, #tpu.memory_space<vmem>>, vector<128x128xf32>,
    } else {
    }
    %c0_i32_6 = arith.constant 0 : i32
    %9 = arith.cmpi eq, %arg2, %c0_i32_6 : i32
    %10 = arith.extui %9 : i1 to i32
    %c0_i32_7 = arith.constant 0 : i32
    %11 = arith.cmpi ne, %10, %c0_i32_7 : i32
    scf.if %11 {
      %c0_8 = arith.constant 0 : index
      %c0_9 = arith.constant 0 : index
      %12 = vector.load %arg6[%c0_8, %c0_9] : memref<128x128xf32, #tpu.memory_space<vmem>>, vector<128x128xf32>
      %c0_10 = arith.constant 0 : index
      %c0_11 = arith.constant 0 : index
      %13 = vector.load %arg5[%c0_10, %c0_11] : memref<128x128xf32, #tpu.memory_space<vmem>>, vector<128x128xf32>
      tpu.vector_store %arg5[%c0_10, %c0_11], %12 {strides = array<i32>} : memref<128x128xf32, #tpu.memory_space<vmem>>, vector<128x128xf32>,
    } else {
    }
    return
  }
  func.func @transform_0(%arg0: i32, %arg1: i32, %arg2: i32) -> (i32, i32) {
    %c0_i32 = arith.constant 0 : i32
    return %arg0, %arg2 : i32, i32
  }
  func.func @transform_1(%arg0: i32, %arg1: i32, %arg2: i32) -> (i32, i32) {
    %c0_i32 = arith.constant 0 : i32
    return %arg2, %arg1 : i32, i32
  }
  func.func @transform_2(%arg0: i32, %arg1: i32, %arg2: i32) -> (i32, i32) {
    %c0_i32 = arith.constant 0 : i32
    return %arg0, %arg1 : i32, i32
  }
}

</mosaic_0001>

<llo_original>
// kernel: tpu_custom_call.1
$region0: #{tpu_custom_call.1}
  #allocation0 [shape = 'u32[]', space=smem, size = 0x4, offset = 0x4, fixed_abs, tag = 'smem constant byte address 0x4 - core index']
  #allocation1 [shape = 'u32[144,128]{1,0:T(1,128)}', space=vmem, size = 0x12000, scoped, tag = 'internal scratch']
  #allocation2 [shape = 'f32[128,128]{1,0:T(8,128)}', space=vmem, size = 0x10000, scoped, tag = 'scratch operand']
  %s0 = inlined_call_operand.hbm [shape: f32[128,128], index: 0, kind: input, shape index: {}]
  %s1 = inlined_call_operand.hbm [shape: f32[128,128], index: 1, kind: input, shape index: {}]
  %s2 = inlined_call_operand.hbm [shape: f32[128,128], index: 2, kind: output, shape index: {}]
  %s3 = sld [smem:[#allocation0]]
  $region38: #{tpu_custom_call.1} parent=0
    _
  %s5 = ssub.s32 1, %s3
  %s6 = scalar_select 0, %s5, %s3
  $region1: #{tpu_custom_call.1} parent=0
    #allocation3 [shape = 'u8[65536]{0}', space=vmem, size = 0x10000, scoped, tag = 'input window, operand 0, single buffered']
    #allocation4 [shape = 's32[1]{0}', space=sflag, size = 0x4, scoped, tag = 'scoped memory for tpu_custom_call.1']
    #allocation5 [shape = 's32[1]{0}', space=sflag, size = 0x4, scoped, tag = 'scoped memory for tpu_custom_call.1']
    #allocation6 [shape = 'u8[65536]{0}', space=vmem, size = 0x10000, scoped, tag = 'input window, operand 1, single buffered']
    #allocation7 [shape = 's32[1]{0}', space=sflag, size = 0x4, scoped, tag = 'scoped memory for tpu_custom_call.1']
    #allocation8 [shape = 'u8[65536]{0}', space=vmem, size = 0x10000, scoped, tag = 'output window, operand 0, single buffered']
    %7 = vsyncpa [#allocation4], 0
    %8 = vsyncpa [#allocation7], 0
    %9 = vsyncpa [#allocation5], 0
    // Predicated region
    $region2: #{tpu_custom_call.1} parent=1 // pred_check
      _
    $region3: #{tpu_custom_call.1} parent=1 // pred_check_branch
      %11 = sbr.rel (0) target = $region5
    $region4: #{tpu_custom_call.1} parent=1 // pred_region
      %s13 = ssub.s32 2048, 2048
      %14 = vsyncadd [#allocation4], %s13
      %s15 = sshll.u32 [#allocation3], 4
      %s16 = int_to_ptr.vmem [resolvable:$true] %s15
      %21 = dma.hbm_to_vmem [thread:$0]  %s0, 2048, %s16, [#allocation4], 128, 128, 8
    $region5: #{tpu_custom_call.1} parent=1 // pred_fallthru
      _
    // Predicated region
    $region6: #{tpu_custom_call.1} parent=1 // pred_check
      _
    $region7: #{tpu_custom_call.1} parent=1 // pred_check_branch
      %23 = sbr.rel (0) target = $region9
    $region8: #{tpu_custom_call.1} parent=1 // pred_region
      %s25 = ssub.s32 2048, 2048
      %26 = vsyncadd [#allocation7], %s25
      %s27 = sshll.u32 [#allocation6], 4
      %s28 = int_to_ptr.vmem [resolvable:$true] %s27
      %33 = dma.hbm_to_vmem [thread:$0]  %s1, 2048, %s28, [#allocation7], 128, 128, 8
    $region9: #{tpu_custom_call.1} parent=1 // pred_fallthru
      _
    // Predicated region
    $region10: #{tpu_custom_call.1} parent=1 // pred_check
      _
    $region11: #{tpu_custom_call.1} parent=1 // pred_check_branch
      %35 = sbr.rel (0) target = $region13
    $region12: #{tpu_custom_call.1} parent=1 // pred_region
      %36 = dma.done [#allocation4], 2048
    $region13: #{tpu_custom_call.1} parent=1 // pred_fallthru
      _
    // Predicated region
    $region14: #{tpu_custom_call.1} parent=1 // pred_check
      _
    $region15: #{tpu_custom_call.1} parent=1 // pred_check_branch
      %38 = sbr.rel (0) target = $region17
    $region16: #{tpu_custom_call.1} parent=1 // pred_region
      %39 = dma.done [#allocation7], 2048
    $region17: #{tpu_custom_call.1} parent=1 // pred_fallthru
      _
    %v40 = vld [vmem:[#allocation3] sm:$0xff]
    %v41 = vld [vmem:[#allocation3 + $0x8] sm:$0xff]
    %v42 = vld [vmem:[#allocation3 + $0x10] sm:$0xff]
    %v43 = vld [vmem:[#allocation3 + $0x18] sm:$0xff]
    %v44 = vld [vmem:[#allocation3 + $0x20] sm:$0xff]
    %v45 = vld [vmem:[#allocation3 + $0x28] sm:$0xff]
    %v46 = vld [vmem:[#allocation3 + $0x30] sm:$0xff]
    %v47 = vld [vmem:[#allocation3 + $0x38] sm:$0xff]
    %v48 = vld [vmem:[#allocation3 + $0x40] sm:$0xff]
    %v49 = vld [vmem:[#allocation3 + $0x48] sm:$0xff]
    %v50 = vld [vmem:[#allocation3 + $0x50] sm:$0xff]
    %v51 = vld [vmem:[#allocation3 + $0x58] sm:$0xff]
    %v52 = vld [vmem:[#allocation3 + $0x60] sm:$0xff]
    %v53 = vld [vmem:[#allocation3 + $0x68] sm:$0xff]
    %v54 = vld [vmem:[#allocation3 + $0x70] sm:$0xff]
    %v55 = vld [vmem:[#allocation3 + $0x78] sm:$0xff]
    %v56 = vld [vmem:[#allocation6] sm:$0xff]
    %v57 = vld [vmem:[#allocation6 + $0x8] sm:$0xff]
    %v58 = vld [vmem:[#allocation6 + $0x10] sm:$0xff]
    %v59 = vld [vmem:[#allocation6 + $0x18] sm:$0xff]
    %v60 = vld [vmem:[#allocation6 + $0x20] sm:$0xff]
    %v61 = vld [vmem:[#allocation6 + $0x28] sm:$0xff]
    %v62 = vld [vmem:[#allocation6 + $0x30] sm:$0xff]
    %v63 = vld [vmem:[#allocation6 + $0x38] sm:$0xff]
    %v64 = vld [vmem:[#allocation6 + $0x40] sm:$0xff]
    %v65 = vld [vmem:[#allocation6 + $0x48] sm:$0xff]
    %v66 = vld [vmem:[#allocation6 + $0x50] sm:$0xff]
    %v67 = vld [vmem:[#allocation6 + $0x58] sm:$0xff]
    %v68 = vld [vmem:[#allocation6 + $0x60] sm:$0xff]
    %v69 = vld [vmem:[#allocation6 + $0x68] sm:$0xff]
    %v70 = vld [vmem:[#allocation6 + $0x70] sm:$0xff]
    %v71 = vld [vmem:[#allocation6 + $0x78] sm:$0xff]
    %72 = vmatprep.subr.mxu0 0.0
    %73 = vmatpush1.msra.mxu0 %v56
    %74 = vmatprep.subr.mxu0 0.0
    %75 = vmatpush1.msra.mxu0 %v57
    %76 = vmatprep.subr.mxu0 0.0
    %77 = vmatpush1.msra.mxu0 %v58
    %78 = vmatprep.subr.mxu0 0.0
    %79 = vmatpush1.msra.mxu0 %v59
    %80 = vmatprep.subr.mxu0 0.0
    %81 = vmatpush1.msra.mxu0 %v60
    %82 = vmatprep.subr.mxu0 0.0
    %83 = vmatpush1.msra.mxu0 %v61
    %84 = vmatprep.subr.mxu0 0.0
    %85 = vmatpush1.msra.mxu0 %v62
    %86 = vmatprep.subr.mxu0 0.0
    %87 = vmatpush1.msra.mxu0 %v63
    %88 = vmatprep.subr.mxu0 0.0
    %89 = vmatpush1.msra.mxu0 %v64
    %90 = vmatprep.subr.mxu0 0.0
    %91 = vmatpush1.msra.mxu0 %v65
    %92 = vmatprep.subr.mxu0 0.0
    %93 = vmatpush1.msra.mxu0 %v66
    %94 = vmatprep.subr.mxu0 0.0
    %95 = vmatpush1.msra.mxu0 %v67
    %96 = vmatprep.subr.mxu0 0.0
    %97 = vmatpush1.msra.mxu0 %v68
    %98 = vmatprep.subr.mxu0 0.0
    %99 = vmatpush1.msra.mxu0 %v69
    %100 = vmatprep.subr.mxu0 0.0
    %101 = vmatpush1.msra.mxu0 %v70
    %102 = vmatprep.subr.mxu0 0.0
    %103 = vmatpush1.msra.mxu0 %v71
    %104 = vmatprep.subr.mxu0 0.0
    %105 = vmatpush1.msra.mxu0 0.0
    %106 = vmatprep.subr.mxu0 0.0
    %107 = vmatpush1.msra.mxu0 0.0
    %108 = vmatprep.subr.mxu0 0.0
    %109 = vmatpush1.msra.mxu0 0.0
    %110 = vmatprep.subr.mxu0 0.0
    %111 = vmatpush1.msra.mxu0 0.0
    %112 = vmatprep.subr.mxu0 0.0
    %113 = vmatpush1.msra.mxu0 0.0
    %114 = vmatprep.subr.mxu0 0.0
    %115 = vmatpush1.msra.mxu0 0.0
    %116 = vmatprep.subr.mxu0 0.0
    %117 = vmatpush1.msra.mxu0 0.0
    %118 = vmatprep.subr.mxu0 0.0
    %119 = vmatpush1.msra.mxu0 0.0
    %120 = vmatprep.subr.mxu0 0.0
    %121 = vmatpush1.msra.mxu0 0.0
    %122 = vmatprep.subr.mxu0 0.0
    %123 = vmatpush1.msra.mxu0 0.0
    %124 = vmatprep.subr.mxu0 0.0
    %125 = vmatpush1.msra.mxu0 0.0
    %126 = vmatprep.subr.mxu0 0.0
    %127 = vmatpush1.msra.mxu0 0.0
    %128 = vmatprep.subr.mxu0 0.0
    %129 = vmatpush1.msra.mxu0 0.0
    %130 = vmatprep.subr.mxu0 0.0
    %131 = vmatpush1.msra.mxu0 0.0
    %132 = vmatprep.subr.mxu0 0.0
    %133 = vmatpush1.msra.mxu0 0.0
    %134 = vmatprep.subr.mxu0 0.0
    %135 = vmatpush1.msra.mxu0 0.0
    %136 = vmatprep.mubr.f32.mxu0 0.0
    %137 = vmatmul.mubr.f32.gmra.mrb[0].mxu0 %v40
    %v138 = vpop.f32.mrb[0].mxu0
    %v139 = vadd.f32 0.0, %v138
    %v140 = vpop.f32.mrb[0].mxu0
    %141 = vmatprep.mubr.f32.mxu0 0.0
    %142 = vmatmul.mubr.f32.gmra.mrb[0].mxu0 %v41
    %v143 = vpop.f32.mrb[0].mxu0
    %v144 = vadd.f32 0.0, %v143
    %v145 = vpop.f32.mrb[0].mxu0
    %146 = vmatprep.mubr.f32.mxu0 0.0
    %147 = vmatmul.mubr.f32.gmra.mrb[0].mxu0 %v42
    %v148 = vpop.f32.mrb[0].mxu0
    %v149 = vadd.f32 0.0, %v148
    %v150 = vpop.f32.mrb[0].mxu0
    %151 = vmatprep.mubr.f32.mxu0 0.0
    %152 = vmatmul.mubr.f32.gmra.mrb[0].mxu0 %v43
    %v153 = vpop.f32.mrb[0].mxu0
    %v154 = vadd.f32 0.0, %v153
    %v155 = vpop.f32.mrb[0].mxu0
    %156 = vmatprep.mubr.f32.mxu0 0.0
    %157 = vmatmul.mubr.f32.gmra.mrb[0].mxu0 %v44
    %v158 = vpop.f32.mrb[0].mxu0
    %v159 = vadd.f32 0.0, %v158
    %v160 = vpop.f32.mrb[0].mxu0
    %161 = vmatprep.mubr.f32.mxu0 0.0
    %162 = vmatmul.mubr.f32.gmra.mrb[0].mxu0 %v45
    %v163 = vpop.f32.mrb[0].mxu0
    %v164 = vadd.f32 0.0, %v163
    %v165 = vpop.f32.mrb[0].mxu0
    %166 = vmatprep.mubr.f32.mxu0 0.0
    %167 = vmatmul.mubr.f32.gmra.mrb[0].mxu0 %v46
    %v168 = vpop.f32.mrb[0].mxu0
    %v169 = vadd.f32 0.0, %v168
    %v170 = vpop.f32.mrb[0].mxu0
    %171 = vmatprep.mubr.f32.mxu0 0.0
    %172 = vmatmul.mubr.f32.gmra.mrb[0].mxu0 %v47
    %v173 = vpop.f32.mrb[0].mxu0
    %v174 = vadd.f32 0.0, %v173
    %v175 = vpop.f32.mrb[0].mxu0
    %176 = vmatprep.mubr.f32.mxu0 0.0
    %177 = vmatmul.mubr.f32.gmra.mrb[0].mxu0 %v48
    %v178 = vpop.f32.mrb[0].mxu0
    %v179 = vadd.f32 0.0, %v178
    %v180 = vpop.f32.mrb[0].mxu0
    %181 = vmatprep.mubr.f32.mxu0 0.0
    %182 = vmatmul.mubr.f32.gmra.mrb[0].mxu0 %v49
    %v183 = vpop.f32.mrb[0].mxu0
    %v184 = vadd.f32 0.0, %v183
    %v185 = vpop.f32.mrb[0].mxu0
    %186 = vmatprep.mubr.f32.mxu0 0.0
    %187 = vmatmul.mubr.f32.gmra.mrb[0].mxu0 %v50
    %v188 = vpop.f32.mrb[0].mxu0
    %v189 = vadd.f32 0.0, %v188
    %v190 = vpop.f32.mrb[0].mxu0
    %191 = vmatprep.mubr.f32.mxu0 0.0
    %192 = vmatmul.mubr.f32.gmra.mrb[0].mxu0 %v51
    %v193 = vpop.f32.mrb[0].mxu0
    %v194 = vadd.f32 0.0, %v193
    %v195 = vpop.f32.mrb[0].mxu0
    %196 = vmatprep.mubr.f32.mxu0 0.0
    %197 = vmatmul.mubr.f32.gmra.mrb[0].mxu0 %v52
    %v198 = vpop.f32.mrb[0].mxu0
    %v199 = vadd.f32 0.0, %v198
    %v200 = vpop.f32.mrb[0].mxu0
    %201 = vmatprep.mubr.f32.mxu0 0.0
    %202 = vmatmul.mubr.f32.gmra.mrb[0].mxu0 %v53
    %v203 = vpop.f32.mrb[0].mxu0
    %v204 = vadd.f32 0.0, %v203
    %v205 = vpop.f32.mrb[0].mxu0
    %206 = vmatprep.mubr.f32.mxu0 0.0
    %207 = vmatmul.mubr.f32.gmra.mrb[0].mxu0 %v54
    %v208 = vpop.f32.mrb[0].mxu0
    %v209 = vadd.f32 0.0, %v208
    %v210 = vpop.f32.mrb[0].mxu0
    %211 = vmatprep.mubr.f32.mxu0 0.0
    %212 = vmatmul.mubr.f32.gmra.mrb[0].mxu0 %v55
    %v213 = vpop.f32.mrb[0].mxu0
    %v214 = vadd.f32 0.0, %v213
    %v215 = vpop.f32.mrb[0].mxu0
    %216 = vdwg.mxu0
    %p217 = scmp.eq.s32.totalorder 0, 0
    // Predicated region
    $region18: #{tpu_custom_call.1} parent=1 // pred_check
      %p218 = pneg %p217
    $region19: #{tpu_custom_call.1} parent=1 // pred_check_branch
      %220 = sbr.rel (%p218) target = $region21
    $region20: #{tpu_custom_call.1} parent=1 // pred_region
      %221 = vst [vmem:[#allocation2] sm:$0xff] %v139
      %222 = vst [vmem:[#allocation2 + $0x8] sm:$0xff] %v144
      %223 = vst [vmem:[#allocation2 + $0x10] sm:$0xff] %v149
      %224 = vst [vmem:[#allocation2 + $0x18] sm:$0xff] %v154
      %225 = vst [vmem:[#allocation2 + $0x20] sm:$0xff] %v159
      %226 = vst [vmem:[#allocation2 + $0x28] sm:$0xff] %v164
      %227 = vst [vmem:[#allocation2 + $0x30] sm:$0xff] %v169
      %228 = vst [vmem:[#allocation2 + $0x38] sm:$0xff] %v174
      %229 = vst [vmem:[#allocation2 + $0x40] sm:$0xff] %v179
      %230 = vst [vmem:[#allocation2 + $0x48] sm:$0xff] %v184
      %231 = vst [vmem:[#allocation2 + $0x50] sm:$0xff] %v189
      %232 = vst [vmem:[#allocation2 + $0x58] sm:$0xff] %v194
      %233 = vst [vmem:[#allocation2 + $0x60] sm:$0xff] %v199
      %234 = vst [vmem:[#allocation2 + $0x68] sm:$0xff] %v204
      %235 = vst [vmem:[#allocation2 + $0x70] sm:$0xff] %v209
      %236 = vst [vmem:[#allocation2 + $0x78] sm:$0xff] %v214
    $region21: #{tpu_custom_call.1} parent=1 // pred_fallthru
      _
    %p237 = scmp.gt.s32.totalorder 0, 0
    // Predicated region
    $region22: #{tpu_custom_call.1} parent=1 // pred_check
      %p238 = pneg %p237
    $region23: #{tpu_custom_call.1} parent=1 // pred_check_branch
      %240 = sbr.rel (%p238) target = $region25
    $region24: #{tpu_custom_call.1} parent=1 // pred_region
      %v241 = vld [vmem:[#allocation2] sm:$0xff]
      %v242 = vld [vmem:[#allocation2 + $0x8] sm:$0xff]
      %v243 = vld [vmem:[#allocation2 + $0x10] sm:$0xff]
      %v244 = vld [vmem:[#allocation2 + $0x18] sm:$0xff]
      %v245 = vld [vmem:[#allocation2 + $0x20] sm:$0xff]
      %v246 = vld [vmem:[#allocation2 + $0x28] sm:$0xff]
      %v247 = vld [vmem:[#allocation2 + $0x30] sm:$0xff]
      %v248 = vld [vmem:[#allocation2 + $0x38] sm:$0xff]
      %v249 = vld [vmem:[#allocation2 + $0x40] sm:$0xff]
      %v250 = vld [vmem:[#allocation2 + $0x48] sm:$0xff]
      %v251 = vld [vmem:[#allocation2 + $0x50] sm:$0xff]
      %v252 = vld [vmem:[#allocation2 + $0x58] sm:$0xff]
      %v253 = vld [vmem:[#allocation2 + $0x60] sm:$0xff]
      %v254 = vld [vmem:[#allocation2 + $0x68] sm:$0xff]
      %v255 = vld [vmem:[#allocation2 + $0x70] sm:$0xff]
      %v256 = vld [vmem:[#allocation2 + $0x78] sm:$0xff]
      %v257 = vadd.f32 %v241, %v139
      %v258 = vadd.f32 %v242, %v144
      %v259 = vadd.f32 %v243, %v149
      %v260 = vadd.f32 %v244, %v154
      %v261 = vadd.f32 %v245, %v159
      %v262 = vadd.f32 %v246, %v164
      %v263 = vadd.f32 %v247, %v169
      %v264 = vadd.f32 %v248, %v174
      %v265 = vadd.f32 %v249, %v179
      %v266 = vadd.f32 %v250, %v184
      %v267 = vadd.f32 %v251, %v189
      %v268 = vadd.f32 %v252, %v194
      %v269 = vadd.f32 %v253, %v199
      %v270 = vadd.f32 %v254, %v204
      %v271 = vadd.f32 %v255, %v209
      %v272 = vadd.f32 %v256, %v214
      %273 = vst [vmem:[#allocation2] sm:$0xff] %v257
      %274 = vst [vmem:[#allocation2 + $0x8] sm:$0xff] %v258
      %275 = vst [vmem:[#allocation2 + $0x10] sm:$0xff] %v259
      %276 = vst [vmem:[#allocation2 + $0x18] sm:$0xff] %v260
      %277 = vst [vmem:[#allocation2 + $0x20] sm:$0xff] %v261
      %278 = vst [vmem:[#allocation2 + $0x28] sm:$0xff] %v262
      %279 = vst [vmem:[#allocation2 + $0x30] sm:$0xff] %v263
      %280 = vst [vmem:[#allocation2 + $0x38] sm:$0xff] %v264
      %281 = vst [vmem:[#allocation2 + $0x40] sm:$0xff] %v265
      %282 = vst [vmem:[#allocation2 + $0x48] sm:$0xff] %v266
      %283 = vst [vmem:[#allocation2 + $0x50] sm:$0xff] %v267
      %284 = vst [vmem:[#allocation2 + $0x58] sm:$0xff] %v268
      %285 = vst [vmem:[#allocation2 + $0x60] sm:$0xff] %v269
      %286 = vst [vmem:[#allocation2 + $0x68] sm:$0xff] %v270
      %287 = vst [vmem:[#allocation2 + $0x70] sm:$0xff] %v271
      %288 = vst [vmem:[#allocation2 + $0x78] sm:$0xff] %v272
    $region25: #{tpu_custom_call.1} parent=1 // pred_fallthru
      _
    // Predicated region
    $region26: #{tpu_custom_call.1} parent=1 // pred_check
      %p289 = pneg %p217
    $region27: #{tpu_custom_call.1} parent=1 // pred_check_branch
      %291 = sbr.rel (%p289) target = $region29
    $region28: #{tpu_custom_call.1} parent=1 // pred_region
      %v292 = vld [vmem:[#allocation2] sm:$0xff]
      %v293 = vld [vmem:[#allocation2 + $0x8] sm:$0xff]
      %v294 = vld [vmem:[#allocation2 + $0x10] sm:$0xff]
      %v295 = vld [vmem:[#allocation2 + $0x18] sm:$0xff]
      %v296 = vld [vmem:[#allocation2 + $0x20] sm:$0xff]
      %v297 = vld [vmem:[#allocation2 + $0x28] sm:$0xff]
      %v298 = vld [vmem:[#allocation2 + $0x30] sm:$0xff]
      %v299 = vld [vmem:[#allocation2 + $0x38] sm:$0xff]
      %v300 = vld [vmem:[#allocation2 + $0x40] sm:$0xff]
      %v301 = vld [vmem:[#allocation2 + $0x48] sm:$0xff]
      %v302 = vld [vmem:[#allocation2 + $0x50] sm:$0xff]
      %v303 = vld [vmem:[#allocation2 + $0x58] sm:$0xff]
      %v304 = vld [vmem:[#allocation2 + $0x60] sm:$0xff]
      %v305 = vld [vmem:[#allocation2 + $0x68] sm:$0xff]
      %v306 = vld [vmem:[#allocation2 + $0x70] sm:$0xff]
      %v307 = vld [vmem:[#allocation2 + $0x78] sm:$0xff]
      %308 = vst [vmem:[#allocation8] sm:$0xff] %v292
      %309 = vst [vmem:[#allocation8 + $0x8] sm:$0xff] %v293
      %310 = vst [vmem:[#allocation8 + $0x10] sm:$0xff] %v294
      %311 = vst [vmem:[#allocation8 + $0x18] sm:$0xff] %v295
      %312 = vst [vmem:[#allocation8 + $0x20] sm:$0xff] %v296
      %313 = vst [vmem:[#allocation8 + $0x28] sm:$0xff] %v297
      %314 = vst [vmem:[#allocation8 + $0x30] sm:$0xff] %v298
      %315 = vst [vmem:[#allocation8 + $0x38] sm:$0xff] %v299
      %316 = vst [vmem:[#allocation8 + $0x40] sm:$0xff] %v300
      %317 = vst [vmem:[#allocation8 + $0x48] sm:$0xff] %v301
      %318 = vst [vmem:[#allocation8 + $0x50] sm:$0xff] %v302
      %319 = vst [vmem:[#allocation8 + $0x58] sm:$0xff] %v303
      %320 = vst [vmem:[#allocation8 + $0x60] sm:$0xff] %v304
      %321 = vst [vmem:[#allocation8 + $0x68] sm:$0xff] %v305
      %322 = vst [vmem:[#allocation8 + $0x70] sm:$0xff] %v306
      %323 = vst [vmem:[#allocation8 + $0x78] sm:$0xff] %v307
    $region29: #{tpu_custom_call.1} parent=1 // pred_fallthru
      _
    // Predicated region
    $region30: #{tpu_custom_call.1} parent=1 // pred_check
      _
    $region31: #{tpu_custom_call.1} parent=1 // pred_check_branch
      %325 = sbr.rel (0) target = $region33
    $region32: #{tpu_custom_call.1} parent=1 // pred_region
      %s327 = ssub.s32 2048, 2048
      %328 = vsyncadd [#allocation5], %s327
      %s329 = sshll.u32 [#allocation8], 4
      %s330 = int_to_ptr.vmem [resolvable:$true] %s329
      %335 = dma.vmem_to_hbm [thread:$0]  %s330, 2048, %s2, [#allocation5], 128, 128, 8
    $region33: #{tpu_custom_call.1} parent=1 // pred_fallthru
      _
    // Predicated region
    $region34: #{tpu_custom_call.1} parent=1 // pred_check
      _
    $region35: #{tpu_custom_call.1} parent=1 // pred_check_branch
      %337 = sbr.rel (0) target = $region37
    $region36: #{tpu_custom_call.1} parent=1 // pred_region
      %338 = dma.done [#allocation5], 2048
    $region37: #{tpu_custom_call.1} parent=1 // pred_fallthru
      _
    %339 = vsyncpa [#allocation4], 1
    %340 = vsyncpa [#allocation7], 1
    %341 = vsyncpa [#allocation5], 1

</llo_original>
